<compile_context>
chip_gen: v6e
topology: v6e:2x2x1
jax: 0.10.0
libtpu: 0.0.40
codegen_flags: <defaults>
</compile_context>

<pallas_src>
import functools

import jax
import jax.numpy as jnp
from jax.experimental import pallas as pl
from jax.experimental.pallas import tpu as pltpu


def _round_up(x, m):
    return (x + m - 1) // m * m


def _conv_kernel(xm_ref, xh_ref, w_ref, b_ref, o_ref, *, wg, l_out):
    # xm_ref: (L_out, Kp)  bf16  main rows: output rows r..r+tHO-1, 6 taps (hp,kw)
    # xh_ref: (Wg, Kp)     bf16  halo row : phase-0 taps of output row r+tHO
    # w_ref : (2, Kp, Cop) bf16  [0] = kh in {0,1} taps, [1] = kh == 2 tap (zero-padded)
    # b_ref : (1, Cop)     f32
    # o_ref : (L_out, Cop) f32
    acc = jnp.dot(xm_ref[...], w_ref[0], preferred_element_type=jnp.float32)
    o_ref[...] = acc + b_ref[...]
    if l_out > wg:
        # kh == 2 tap for all but the last output row of this tile: the needed
        # phase-0 rows are the main rows shifted down by one (aligned offset Wg).
        o_ref[pl.ds(0, l_out - wg), :] += jnp.dot(
            xm_ref[pl.ds(wg, l_out - wg), :], w_ref[1],
            preferred_element_type=jnp.float32)
    # kh == 2 tap for the last output row of this tile comes from the halo input.
    o_ref[pl.ds(l_out - wg, wg), :] += jnp.dot(
        xh_ref[...], w_ref[1], preferred_element_type=jnp.float32)


def downsample_forward(x_nchw, weight, bias, *, compute_dtype=jnp.bfloat16,
                       target_block_elems=1 << 20):
    """Conv2d(C, C, 3, stride=2, padding=1) forward.

    x_nchw: (N, C, H, W) f32, weight: (C, C, 3, 3) f32 (PyTorch OIHW), bias: (C,)
    returns (N, C, HO, WO) with HO = (H-1)//2 + 1, WO = (W-1)//2 + 1.
    """
    N, C, H, W = x_nchw.shape
    HO = (H - 1) // 2 + 1
    WO = (W - 1) // 2 + 1

    Cop = _round_up(C, 128)        # lane-dense output channels
    Kp = _round_up(6 * C, 128)     # 128-aligned GEMM contraction dim (2 h-phases x 3 kw)
    Wg = _round_up(WO, 16)         # bf16 sublane-aligned output-column count

    # output rows per grid step -> bounds the activation block (~2 MB bf16) per step
    tHO = max(1, min(HO, (target_block_elems // (Wg * Kp)) or 1))
    nblk = pl.cdiv(HO, tHO)
    L_out = tHO * Wg

    # ------------- wrapper glue (bf16 end-to-end, ~1.5x activation bytes) -------------
    x_nhwc = jnp.transpose(x_nchw, (0, 2, 3, 1)).astype(compute_dtype)    # (N, H, W, C)
    R_pad = nblk * tHO + 1                      # +1 phase-row so the last tile has its halo
    Hp, Wp = 2 * R_pad, 2 * Wg + 1
    x_pad = jnp.pad(x_nhwc, ((0, 0), (1, Hp - H - 1), (1, Wp - W - 1), (0, 0)))

    # 6 channel groups = (h-phase hp in {0,1}) x (kw in {0,1,2}):
    #   xg[n, r, wo, (hp*3+kw)*C + c] = x_pad[n, 2r+hp, 2wo+kw, c]
    taps = [x_pad[:, hp:hp + 2 * R_pad:2, kw:kw + 2 * Wg:2, :]
            for hp in (0, 1) for kw in range(3)]
    xg = jnp.stack(taps, axis=3).reshape(N, R_pad, Wg, 6 * C)
    xg = jnp.pad(xg, ((0, 0), (0, 0), (0, 0), (0, Kp - 6 * C)))           # (N,R_pad,Wg,Kp)

    halo = xg[:, tHO::tHO][:, :nblk]                                      # (N,nblk,Wg,Kp) tiny
    xg_flat = xg.reshape(N, R_pad * Wg, Kp)                               # contiguous reshape

    # weights: (Cout,Cin,3,3) -> (kh,kw,Cin,Cout), packed as two GEMM matrices
    w_t = jnp.transpose(weight, (2, 3, 1, 0))                             # (3, 3, Cin, Cout)
    w0 = jnp.pad(w_t[0:2].reshape(6 * C, C), ((0, Kp - 6 * C), (0, Cop - C)))   # kh in {0,1}
    w1 = jnp.pad(w_t[2].reshape(3 * C, C), ((0, Kp - 3 * C), (0, Cop - C)))     # kh == 2
    w01 = jnp.stack([w0, w1]).astype(compute_dtype)                       # (2, Kp, Cop)
    b_row = jnp.pad(bias, (0, Cop - C)).reshape(1, Cop).astype(jnp.float32)

    # ------------- Pallas hot path: three aligned, lane-dense MXU GEMMs -------------
    kernel = functools.partial(_conv_kernel, wg=Wg, l_out=L_out)
    out_tiles = pl.pallas_call(
        kernel,
        out_shape=jax.ShapeDtypeStruct((N, nblk, L_out, Cop), jnp.float32),
        grid=(N, nblk),
        in_specs=[
            pl.BlockSpec((None, L_out, Kp), lambda n, i: (n, i, 0)),
            pl.BlockSpec((None, None, Wg, Kp), lambda n, i: (n, i, 0, 0)),
            # constant index_map keeps weight / bias VMEM-resident across the grid
            pl.BlockSpec((2, Kp, Cop), lambda n, i: (0, 0, 0)),
            pl.BlockSpec((1, Cop), lambda n, i: (0, 0)),
        ],
        out_specs=pl.BlockSpec((None, None, L_out, Cop), lambda n, i: (n, i, 0, 0)),
        compiler_params=pltpu.CompilerParams(
            dimension_semantics=("parallel", "parallel")),
    )(xg_flat, halo, w01, b_row)

    # (N, nblk, L_out, Cop) -> (N, HO, WO, C) -> NCHW (padded rows/cols/chans sliced off)
    out = out_tiles.reshape(N, nblk * tHO, Wg, Cop)[:, :HO, :WO, :C]
    return jnp.transpose(out, (0, 3, 1, 2)).astype(x_nchw.dtype)


def init_downsample_params(key, channels):
    """Deterministic init matching nn.Conv2d default (kaiming-uniform a=sqrt(5))."""
    fan_in = channels * 3 * 3
    bound = 1.0 / jnp.sqrt(jnp.float32(fan_in))
    k_w, k_b = jax.random.split(key)
    weight = jax.random.uniform(
        k_w, (channels, channels, 3, 3), jnp.float32, -bound, bound)
    bias = jax.random.uniform(k_b, (channels,), jnp.float32, -bound, bound)
    return weight, bias


if __name__ == "__main__":
    key = jax.random.PRNGKey(0)
    k_x, k_p = jax.random.split(key)

    N, C, H, W = 2, 4, 16, 16
    x = jax.random.normal(k_x, (N, C, H, W), jnp.float32)
    weight, bias = init_downsample_params(k_p, C)

    out = jax.block_until_ready(downsample_forward(x, weight, bias))
    assert out.shape == (N, C, H // 2, W // 2), out.shape

    # Reference: XLA conv on the same bf16-rounded operands (the kernel feeds the MXU
    # bf16 inputs with f32 accumulation), f32 bias.  Differences are only f32
    # accumulation-order rounding.
    x_r = x.astype(jnp.bfloat16).astype(jnp.float32)
    w_r = weight.astype(jnp.bfloat16).astype(jnp.float32)
    ref = jax.lax.conv_general_dilated(
        x_r, w_r,
        window_strides=(2, 2),
        padding=((1, 1), (1, 1)),
        dimension_numbers=("NCHW", "OIHW", "NCHW"),
    ) + bias.reshape(1, C, 1, 1)
    max_err = float(jnp.max(jnp.abs(out - ref)))
    assert jnp.allclose(out, ref, atol=1e-4, rtol=1e-4), max_err

    print("KERNEL_OK")
</pallas_src>

<mosaic_0001>
module attributes {stable_mosaic.version = 11 : i64} {
  func.func @_conv_kernel(%arg0: i32, %arg1: i32, %arg2: memref<1x128x128xbf16, #tpu.memory_space<vmem>>, %arg3: memref<1x1x16x128xbf16, #tpu.memory_space<vmem>>, %arg4: memref<2x128x128xbf16, #tpu.memory_space<vmem>>, %arg5: memref<1x128xf32, #tpu.memory_space<vmem>>, %arg6: memref<1x1x128x128xf32, #tpu.memory_space<vmem>>) attributes {dimension_semantics = [#tpu.dimension_semantics<parallel>, #tpu.dimension_semantics<parallel>], iteration_bounds = array<i64: 2, 1>, scalar_prefetch = 0 : i64, scratch_operands = 0 : i64, tpu.core_type = #tpu.core_type<tc>, window_params = [{transform_indices = @transform_0, window_bounds = array<i64: 1, 128, 128>}, {transform_indices = @transform_1, window_bounds = array<i64: 1, 1, 16, 128>}, {pipeline_mode = #tpu.pipeline_mode<synchronous>, transform_indices = @transform_2, window_bounds = array<i64: 2, 128, 128>}, {pipeline_mode = #tpu.pipeline_mode<synchronous>, transform_indices = @transform_3, window_bounds = array<i64: 1, 128>}, {transform_indices = @transform_4, window_bounds = array<i64: 1, 1, 128, 128>}]} {
    %c0 = arith.constant 0 : index
    %c0_0 = arith.constant 0 : index
    %c0_1 = arith.constant 0 : index
    %0 = vector.load %arg2[%c0, %c0_0, %c0_1] : memref<1x128x128xbf16, #tpu.memory_space<vmem>>, vector<1x128x128xbf16>
    %1 = vector.shape_cast %0 : vector<1x128x128xbf16> to vector<128x128xbf16>
    %c0_2 = arith.constant 0 : index
    %c0_3 = arith.constant 0 : index
    %c0_4 = arith.constant 0 : index
    %2 = vector.load %arg4[%c0_2, %c0_3, %c0_4] : memref<2x128x128xbf16, #tpu.memory_space<vmem>>, vector<1x128x128xbf16>
    %3 = vector.shape_cast %2 : vector<1x128x128xbf16> to vector<128x128xbf16>
    %cst = arith.constant dense<0.000000e+00> : vector<128x128xf32>
    %4 = tpu.matmul %1, %3, %cst {dimension_numbers = #tpu.dot_dimension_numbers<[1], [0], [0], [1], [0, 0, 1, 1], [], []>} : vector<128x128xbf16>, vector<128x128xbf16>, vector<128x128xf32> -> vector<128x128xf32>
    %c0_5 = arith.constant 0 : index
    %c0_6 = arith.constant 0 : index
    %5 = vector.load %arg5[%c0_5, %c0_6] : memref<1x128xf32, #tpu.memory_space<vmem>>, vector<1x128xf32>
    %6 = vector.broadcast %5 : vector<1x128xf32> to vector<128x128xf32>
    %7 = arith.addf %4, %6 : vector<128x128xf32>
    %c0_7 = arith.constant 0 : index
    %c0_8 = arith.constant 0 : index
    %c0_9 = arith.constant 0 : index
    %c0_10 = arith.constant 0 : index
    %8 = vector.load %arg6[%c0_7, %c0_8, %c0_9, %c0_10] : memref<1x1x128x128xf32, #tpu.memory_space<vmem>>, vector<1x1x128x128xf32>
    %9 = vector.shape_cast %8 : vector<1x1x128x128xf32> to vector<128x128xf32>
    %10 = vector.shape_cast %7 : vector<128x128xf32> to vector<1x1x128x128xf32>
    tpu.vector_store %arg6[%c0_7, %c0_8, %c0_9, %c0_10], %10 {strides = array<i32>} : memref<1x1x128x128xf32, #tpu.memory_space<vmem>>, vector<1x1x128x128xf32>,
    %c0_11 = arith.constant 0 : index
    %c0_12 = arith.constant 0 : index
    %c0_13 = arith.constant 0 : index
    %c0_14 = arith.constant 0 : index
    %11 = vector.load %arg6[%c0_11, %c0_12, %c0_13, %c0_14] : memref<1x1x128x128xf32, #tpu.memory_space<vmem>>, vector<1x1x112x128xf32>
    %12 = vector.shape_cast %11 : vector<1x1x112x128xf32> to vector<112x128xf32>
    %c0_15 = arith.constant 0 : index
    %c16 = arith.constant 16 : index
    %c0_16 = arith.constant 0 : index
    %13 = vector.load %arg2[%c0_15, %c16, %c0_16] : memref<1x128x128xbf16, #tpu.memory_space<vmem>>, vector<1x112x128xbf16>
    %14 = vector.shape_cast %13 : vector<1x112x128xbf16> to vector<112x128xbf16>
    %c1 = arith.constant 1 : index
    %c0_17 = arith.constant 0 : index
    %c0_18 = arith.constant 0 : index
    %15 = vector.load %arg4[%c1, %c0_17, %c0_18] : memref<2x128x128xbf16, #tpu.memory_space<vmem>>, vector<1x128x128xbf16>
    %16 = vector.shape_cast %15 : vector<1x128x128xbf16> to vector<128x128xbf16>
    %cst_19 = arith.constant dense<0.000000e+00> : vector<112x128xf32>
    %17 = tpu.matmul %14, %16, %cst_19 {dimension_numbers = #tpu.dot_dimension_numbers<[1], [0], [0], [1], [0, 0, 1, 1], [], []>} : vector<112x128xbf16>, vector<128x128xbf16>, vector<112x128xf32> -> vector<112x128xf32>
    %18 = arith.addf %12, %17 : vector<112x128xf32>
    %c0_20 = arith.constant 0 : index
    %c0_21 = arith.constant 0 : index
    %c0_22 = arith.constant 0 : index
    %c0_23 = arith.constant 0 : index
    %19 = vector.load %arg6[%c0_20, %c0_21, %c0_22, %c0_23] : memref<1x1x128x128xf32, #tpu.memory_space<vmem>>, vector<1x1x112x128xf32>
    %20 = vector.shape_cast %19 : vector<1x1x112x128xf32> to vector<112x128xf32>
    %21 = vector.shape_cast %18 : vector<112x128xf32> to vector<1x1x112x128xf32>
    tpu.vector_store %arg6[%c0_20, %c0_21, %c0_22, %c0_23], %21 {strides = array<i32>} : memref<1x1x128x128xf32, #tpu.memory_space<vmem>>, vector<1x1x112x128xf32>,
    %c0_24 = arith.constant 0 : index
    %c0_25 = arith.constant 0 : index
    %c112 = arith.constant 112 : index
    %c0_26 = arith.constant 0 : index
    %22 = vector.load %arg6[%c0_24, %c0_25, %c112, %c0_26] : memref<1x1x128x128xf32, #tpu.memory_space<vmem>>, vector<1x1x16x128xf32>
    %23 = vector.shape_cast %22 : vector<1x1x16x128xf32> to vector<16x128xf32>
    %c0_27 = arith.constant 0 : index
    %c0_28 = arith.constant 0 : index
    %c0_29 = arith.constant 0 : index
    %c0_30 = arith.constant 0 : index
    %24 = vector.load %arg3[%c0_27, %c0_28, %c0_29, %c0_30] : memref<1x1x16x128xbf16, #tpu.memory_space<vmem>>, vector<1x1x16x128xbf16>
    %25 = vector.shape_cast %24 : vector<1x1x16x128xbf16> to vector<16x128xbf16>
    %c1_31 = arith.constant 1 : index
    %c0_32 = arith.constant 0 : index
    %c0_33 = arith.constant 0 : index
    %26 = vector.load %arg4[%c1_31, %c0_32, %c0_33] : memref<2x128x128xbf16, #tpu.memory_space<vmem>>, vector<1x128x128xbf16>
    %27 = vector.shape_cast %26 : vector<1x128x128xbf16> to vector<128x128xbf16>
    %cst_34 = arith.constant dense<0.000000e+00> : vector<16x128xf32>
    %28 = tpu.matmul %25, %27, %cst_34 {dimension_numbers = #tpu.dot_dimension_numbers<[1], [0], [0], [1], [0, 0, 1, 1], [], []>} : vector<16x128xbf16>, vector<128x128xbf16>, vector<16x128xf32> -> vector<16x128xf32>
    %29 = arith.addf %23, %28 : vector<16x128xf32>
    %c0_35 = arith.constant 0 : index
    %c0_36 = arith.constant 0 : index
    %c112_37 = arith.constant 112 : index
    %c0_38 = arith.constant 0 : index
    %30 = vector.load %arg6[%c0_35, %c0_36, %c112_37, %c0_38] : memref<1x1x128x128xf32, #tpu.memory_space<vmem>>, vector<1x1x16x128xf32>
    %31 = vector.shape_cast %30 : vector<1x1x16x128xf32> to vector<16x128xf32>
    %32 = vector.shape_cast %29 : vector<16x128xf32> to vector<1x1x16x128xf32>
    tpu.vector_store %arg6[%c0_35, %c0_36, %c112_37, %c0_38], %32 {strides = array<i32>} : memref<1x1x128x128xf32, #tpu.memory_space<vmem>>, vector<1x1x16x128xf32>,
    return
  }
  func.func @transform_0(%arg0: i32, %arg1: i32) -> (i32, i32, i32) {
    %c0_i32 = arith.constant 0 : i32
    %c0_i32_0 = arith.constant 0 : i32
    return %arg0, %arg1, %c0_i32 : i32, i32, i32
  }
  func.func @transform_1(%arg0: i32, %arg1: i32) -> (i32, i32, i32, i32) {
    %c0_i32 = arith.constant 0 : i32
    %c0_i32_0 = arith.constant 0 : i32
    %c0_i32_1 = arith.constant 0 : i32
    return %arg0, %arg1, %c0_i32, %c0_i32_0 : i32, i32, i32, i32
  }
  func.func @transform_2(%arg0: i32, %arg1: i32) -> (i32, i32, i32) {
    %c0_i32 = arith.constant 0 : i32
    %c0_i32_0 = arith.constant 0 : i32
    %c0_i32_1 = arith.constant 0 : i32
    %c0_i32_2 = arith.constant 0 : i32
    return %c0_i32, %c0_i32_0, %c0_i32_1 : i32, i32, i32
  }
  func.func @transform_3(%arg0: i32, %arg1: i32) -> (i32, i32) {
    %c0_i32 = arith.constant 0 : i32
    %c0_i32_0 = arith.constant 0 : i32
    %c0_i32_1 = arith.constant 0 : i32
    return %c0_i32, %c0_i32_0 : i32, i32
  }
  func.func @transform_4(%arg0: i32, %arg1: i32) -> (i32, i32, i32, i32) {
    %c0_i32 = arith.constant 0 : i32
    %c0_i32_0 = arith.constant 0 : i32
    %c0_i32_1 = arith.constant 0 : i32
    return %arg0, %arg1, %c0_i32, %c0_i32_0 : i32, i32, i32, i32
  }
}

</mosaic_0001>

<llo_original>
// kernel: tpu_custom_call.1
$region0: #{tpu_custom_call.1}
  #allocation0 [shape = 'u32[]', space=smem, size = 0x4, offset = 0x4, fixed_abs, tag = 'smem constant byte address 0x4 - core index']
  #allocation1 [shape = 'u32[144,128]{1,0:T(1,128)}', space=vmem, size = 0x12000, scoped, tag = 'internal scratch']
  %s0 = inlined_call_operand.hbm [shape: bf16[2,144,128], index: 0, kind: input, shape index: {}]
  %s1 = inlined_call_operand.hbm [shape: bf16[2,1,16,128], index: 1, kind: input, shape index: {}]
  %s2 = inlined_call_operand.hbm [shape: bf16[2,128,128], index: 2, kind: input, shape index: {}]
  %s3 = inlined_call_operand.vmem [shape: f32[1,128], index: 3, kind: input, shape index: {}]
  %s4 = inlined_call_operand.hbm [shape: f32[2,1,128,128], index: 4, kind: output, shape index: {}]
  %s5 = sld [smem:[#allocation0]]
  $region61: #{tpu_custom_call.1} parent=0
    _
  %s7 = ssub.s32 1, %s5
  %s8 = scalar_select 0, %s7, %s5
  $region1: #{tpu_custom_call.1} parent=0
    #allocation2 [shape = 'u8[65536]{0}', space=vmem, size = 0x10000, scoped, tag = 'input window, operand 0']
    #allocation3 [shape = 's32[2]{0}', space=sflag, size = 0x8, scoped, tag = 'scoped memory for tpu_custom_call.1']
    #allocation4 [shape = 's32[2]{0}', space=sflag, size = 0x8, scoped, tag = 'scoped memory for tpu_custom_call.1']
    #allocation5 [shape = 'u8[8192]{0}', space=vmem, size = 0x2000, scoped, tag = 'input window, operand 1']
    #allocation6 [shape = 's32[2]{0}', space=sflag, size = 0x8, scoped, tag = 'scoped memory for tpu_custom_call.1']
    #allocation7 [shape = 'u8[65536]{0}', space=vmem, size = 0x10000, scoped, tag = 'input window, operand 2, single buffered']
    #allocation8 [shape = 'u8[131072]{0}', space=vmem, size = 0x20000, scoped, tag = 'output window, operand 0']
    %9 = vsyncpa [#allocation3], 0
    %s10 = scalar_lea.sflag [#allocation3], 1
    %11 = vsyncpa %s10, 0
    %12 = vsyncpa [#allocation6], 0
    %s13 = scalar_lea.sflag [#allocation6], 1
    %14 = vsyncpa %s13, 0
    %15 = vsyncpa [#allocation4], 0
    %s16 = scalar_lea.sflag [#allocation4], 1
    %17 = vsyncpa %s16, 0
    loop: start=0, step=1, limit=4
    $region2: #{tpu_custom_call.1} parent=1 // loop_pre_header
      _
    $region3: #{tpu_custom_call.1} parent=1 // loop_header
      %s19 = sphi 0, %s23
      %p20 = scmp.ge.s32.totalorder %s19, 4
      %s26 = sphi 0, %s38
      %s27 = sphi 0, %s34
      %s28 = sphi 0, %s26
      %s29 = sphi 0, %s27
      %s30 = sphi 0, %s28
      %s31 = sphi 0, %s29
      %s43 = sphi 0, %s45
      %s46 = sphi 0, %s43
      %s47 = sphi 0, %s46
      %s63 = sphi 0, %s47
      %s71 = sphi 0, %s73
      %s74 = sphi 0, %s71
      %s75 = sphi 0, %s74
      %s91 = sphi 0, %s75
      %s95 = sphi 0, %s95
      %s97 = sphi 0, %s95
      %s98 = sphi 0, %s97
      %s112 = sphi 0, %s98
      %s116 = sphi 0, %s116
      %s118 = sphi 0, %s116
      %s119 = sphi 0, %s118
      %s133 = sphi 0, %s119
      %s141 = sphi 0, %s143
      %s144 = sphi 0, %s141
      %s145 = sphi 0, %s144
      %s161 = sphi 0, %s145
    $region4: #{tpu_custom_call.1} parent=1 // loop_header_branch
      %22 = sbr.rel (%p20) target = $region8
    $region5: #{tpu_custom_call.1} parent=1 // loop_body
      %s24 = ssub.s32 %s19, 1
      %s25 = ssub.s32 %s19, 2
      %s32 = sadd.s32 1, %s27
      %p33 = scmp.ge.s32.totalorder %s32, 1
      %s34 = scalar_select %p33, 0, %s32
      %s35 = sadd.s32 1, %s26
      %s36 = scalar_select %p33, %s35, %s26
      %p37 = scmp.ge.s32.totalorder %s36, 2
      %s38 = scalar_select %p37, 0, %s36
      %s39 = ssub.s32 %s26, %s38
      %s40 = ssub.s32 %s27, %s34
      %s41 = sor.u32 %s39, %s40
      %p42 = scmp.eq.s32.totalorder %s41, 0
      %s44 = sadd.s32 %s43, 1
      %s45 = scalar_select %p42, %s43, %s44
      %p48 = pneg %p42
      %p49 = scmp.eq.s32.totalorder %s19, 1
      %p50 = por %p48, %p49
      %p51 = scmp.ne.s32.totalorder %s43, %s46
      %p52 = scmp.eq.s32.totalorder %s19, 0
      %p53 = por %p51, %p52
      %p54 = scmp.ne.s32.totalorder %s43, %s46
      %p55 = scmp.eq.s32.totalorder %s24, 1
      %p56 = por %p54, %p55
      %p57 = scmp.ne.s32.totalorder %s46, %s47
      %p58 = scmp.eq.s32.totalorder %s24, 0
      %p59 = por %p57, %p58
      %p60 = scmp.ne.s32.totalorder %s46, %s47
      %p61 = scmp.eq.s32.totalorder %s25, 1
      %p62 = por %p60, %p61
      %p64 = scmp.ne.s32.totalorder %s47, %s63
      %p65 = scmp.eq.s32.totalorder %s25, 0
      %p66 = por %p64, %p65
      %s67 = ssub.s32 %s26, %s38
      %s68 = ssub.s32 %s27, %s34
      %s69 = sor.u32 %s67, %s68
      %p70 = scmp.eq.s32.totalorder %s69, 0
      %s72 = sadd.s32 %s71, 1
      %s73 = scalar_select %p70, %s71, %s72
      %p76 = pneg %p70
      %p77 = scmp.eq.s32.totalorder %s19, 1
      %p78 = por %p76, %p77
      %p79 = scmp.ne.s32.totalorder %s71, %s74
      %p80 = scmp.eq.s32.totalorder %s19, 0
      %p81 = por %p79, %p80
      %p82 = scmp.ne.s32.totalorder %s71, %s74
      %p83 = scmp.eq.s32.totalorder %s24, 1
      %p84 = por %p82, %p83
      %p85 = scmp.ne.s32.totalorder %s74, %s75
      %p86 = scmp.eq.s32.totalorder %s24, 0
      %p87 = por %p85, %p86
      %p88 = scmp.ne.s32.totalorder %s74, %s75
      %p89 = scmp.eq.s32.totalorder %s25, 1
      %p90 = por %p88, %p89
      %p92 = scmp.ne.s32.totalorder %s75, %s91
      %p93 = scmp.eq.s32.totalorder %s25, 0
      %p94 = por %p92, %p93
      %s96 = sadd.s32 %s95, 1
      %p99 = scmp.eq.s32.totalorder %s19, 1
      %p100 = scmp.ne.s32.totalorder %s95, %s97
      %p101 = scmp.eq.s32.totalorder %s19, 0
      %p102 = por %p100, %p101
      %p103 = scmp.ne.s32.totalorder %s95, %s97
      %p104 = scmp.eq.s32.totalorder %s24, 1
      %p105 = por %p103, %p104
      %p106 = scmp.ne.s32.totalorder %s97, %s98
      %p107 = scmp.eq.s32.totalorder %s24, 0
      %p108 = por %p106, %p107
      %p109 = scmp.ne.s32.totalorder %s97, %s98
      %p110 = scmp.eq.s32.totalorder %s25, 1
      %p111 = por %p109, %p110
      %p113 = scmp.ne.s32.totalorder %s98, %s112
      %p114 = scmp.eq.s32.totalorder %s25, 0
      %p115 = por %p113, %p114
      %s117 = sadd.s32 %s116, 1
      %p120 = scmp.eq.s32.totalorder %s19, 1
      %p121 = scmp.ne.s32.totalorder %s116, %s118
      %p122 = scmp.eq.s32.totalorder %s19, 0
      %p123 = por %p121, %p122
      %p124 = scmp.ne.s32.totalorder %s116, %s118
      %p125 = scmp.eq.s32.totalorder %s24, 1
      %p126 = por %p124, %p125
      %p127 = scmp.ne.s32.totalorder %s118, %s119
      %p128 = scmp.eq.s32.totalorder %s24, 0
      %p129 = por %p127, %p128
      %p130 = scmp.ne.s32.totalorder %s118, %s119
      %p131 = scmp.eq.s32.totalorder %s25, 1
      %p132 = por %p130, %p131
      %p134 = scmp.ne.s32.totalorder %s119, %s133
      %p135 = scmp.eq.s32.totalorder %s25, 0
      %p136 = por %p134, %p135
      %s137 = ssub.s32 %s26, %s38
      %s138 = ssub.s32 %s27, %s34
      %s139 = sor.u32 %s137, %s138
      %p140 = scmp.eq.s32.totalorder %s139, 0
      %s142 = sadd.s32 %s141, 1
      %s143 = scalar_select %p140, %s141, %s142
      %p146 = pneg %p140
      %p147 = scmp.eq.s32.totalorder %s19, 1
      %p148 = por %p146, %p147
      %p149 = scmp.ne.s32.totalorder %s141, %s144
      %p150 = scmp.eq.s32.totalorder %s19, 0
      %p151 = por %p149, %p150
      %p152 = scmp.ne.s32.totalorder %s141, %s144
      %p153 = scmp.eq.s32.totalorder %s24, 1
      %p154 = por %p152, %p153
      %p155 = scmp.ne.s32.totalorder %s144, %s145
      %p156 = scmp.eq.s32.totalorder %s24, 0
      %p157 = por %p155, %p156
      %p158 = scmp.ne.s32.totalorder %s144, %s145
      %p159 = scmp.eq.s32.totalorder %s25, 1
      %p160 = por %p158, %p159
      %p162 = scmp.ne.s32.totalorder %s145, %s161
      %p163 = scmp.eq.s32.totalorder %s25, 0
      %p164 = por %p162, %p163
      %p165 = scmp.le.s32.totalorder 1, %s19
      %p166 = scmp.lt.s32.totalorder %s19, 3
      %p167 = pnand %p165, %p166
      %p168 = pneg %p167
      // Predicated region
      $region9: #{tpu_custom_call.1} parent=5 // pred_check
        _
      $region10: #{tpu_custom_call.1} parent=5 // pred_check_branch
        %170 = sbr.rel (%p167) target = $region12
      $region11: #{tpu_custom_call.1} parent=5 // pred_region
        %s171 = ssub.s32 %s19, 1
        // Predicated region
        $region13: #{tpu_custom_call.1} parent=11 // pred_check
          %p172 = pneg %p108
        $region14: #{tpu_custom_call.1} parent=11 // pred_check_branch
          %174 = sbr.rel (%p172) target = $region16
        $region15: #{tpu_custom_call.1} parent=11 // pred_region
          %s176 = ssub.s32 2048, 2048
          %177 = vsyncadd [#allocation6], %s176
          %s178 = sshll.u32 [#allocation7], 4
          %s179 = int_to_ptr.vmem [resolvable:$true] %s178
          %184 = dma.hbm_to_vmem [thread:$0]  %s2, 2048, %s179, [#allocation6], 64, 64, 4
        $region16: #{tpu_custom_call.1} parent=11 // pred_fallthru
          _
        // Predicated region
        $region17: #{tpu_custom_call.1} parent=11 // pred_check
          %p185 = pneg %p129
        $region18: #{tpu_custom_call.1} parent=11 // pred_check_branch
          %187 = sbr.rel (%p185) target = $region20
        $region19: #{tpu_custom_call.1} parent=11 // pred_region
          _
        $region20: #{tpu_custom_call.1} parent=11 // pred_fallthru
          _
      $region12: #{tpu_custom_call.1} parent=5 // pred_fallthru
        _
      %p188 = scmp.lt.s32.totalorder %s19, 2
      // Predicated region
      $region21: #{tpu_custom_call.1} parent=5 // pred_check
        %p189 = pneg %p188
      $region22: #{tpu_custom_call.1} parent=5 // pred_check_branch
        %191 = sbr.rel (%p189) target = $region24
      $region23: #{tpu_custom_call.1} parent=5 // pred_region
        // Predicated region
        $region25: #{tpu_custom_call.1} parent=23 // pred_check
          %p192 = pneg %p53
        $region26: #{tpu_custom_call.1} parent=23 // pred_check_branch
          %194 = sbr.rel (%p192) target = $region28
        $region27: #{tpu_custom_call.1} parent=23 // pred_region
          %s195 = sand.u32 %s43, 1
          %s196 = scalar_lea.sflag [#allocation3], %s195
          %s197 = sand.u32 %s43, 1
          %s198 = smul.addr %s197, 64
          %s199 = scalar_lea.vmem [#allocation2], %s198
          %s200 = smul.u32 16, %s27
          %s201 = ssub.s32 18, %s200
          %p202 = scmp.lt.s32.totalorder %s201, 16
          %s203 = scalar_select %p202, %s201, 16
          %s204 = smul.u32 64, %s203
          %s206 = ssub.s32 1024, %s204
          %207 = vsyncadd %s196, %s206
          %p208 = scmp.ne.s32.totalorder 0, %s204
          %s209 = smul.addr %s26, 18
          %s210 = sadd.s32 %s200, %s209
          %s211 = smul.addr %s210, 64
          %s212 = scalar_lea.hbm %s0, %s211
          %s213 = smul.u32 4, %s203
          %s214 = sshll.u32 %s199, 4
          %s215 = int_to_ptr.vmem [resolvable:$true] %s214
          %s216 = sshll.u32 %s213, 4
          %220 = dma.hbm_to_vmem [thread:$0]  (%p208), %s212, %s216, %s215, %s196, 64, 64, 4
        $region28: #{tpu_custom_call.1} parent=23 // pred_fallthru
          _
        // Predicated region
        $region29: #{tpu_custom_call.1} parent=23 // pred_check
          %p221 = pneg %p81
        $region30: #{tpu_custom_call.1} parent=23 // pred_check_branch
          %223 = sbr.rel (%p221) target = $region32
        $region31: #{tpu_custom_call.1} parent=23 // pred_region
          %s224 = sand.u32 %s19, 1
          %s225 = scalar_lea.sflag [#allocation6], %s224
          %s226 = sand.u32 %s71, 1
          %s227 = smul.addr %s226, 8
          %s228 = scalar_lea.vmem [#allocation5], %s227
          %s230 = ssub.s32 128, 128
          %231 = vsyncadd %s225, %s230
          %s232 = smul.addr %s27, 2
          %s233 = smul.addr %s26, 2
          %s234 = sadd.s32 %s232, %s233
          %s235 = smul.addr %s234, 64
          %s236 = scalar_lea.hbm %s1, %s235
          %s237 = sshll.u32 %s228, 4
          %s238 = int_to_ptr.vmem [resolvable:$true] %s237
          %243 = dma.hbm_to_vmem [thread:$0]  %s236, 128, %s238, %s225, 64, 64, 4
        $region32: #{tpu_custom_call.1} parent=23 // pred_fallthru
          _
      $region24: #{tpu_custom_call.1} parent=5 // pred_fallthru
        _
      %p244 = scmp.le.s32.totalorder 1, %s19
      %p245 = scmp.lt.s32.totalorder %s19, 3
      %p246 = pnand %p244, %p245
      %p247 = pneg %p246
      // Predicated region
      $region33: #{tpu_custom_call.1} parent=5 // pred_check
        _
      $region34: #{tpu_custom_call.1} parent=5 // pred_check_branch
        %249 = sbr.rel (%p246) target = $region36
      $region35: #{tpu_custom_call.1} parent=5 // pred_region
        %s250 = ssub.s32 %s19, 1
        %s251 = sand.u32 %s46, 1
        %s252 = scalar_lea.sflag [#allocation3], %s251
        %s253 = sand.u32 %s46, 1
        %s254 = smul.addr %s253, 64
        %s255 = scalar_lea.vmem [#allocation2], %s254
        // Predicated region
        $region37: #{tpu_custom_call.1} parent=35 // pred_check
          %p256 = pneg %p59
        $region38: #{tpu_custom_call.1} parent=35 // pred_check_branch
          %258 = sbr.rel (%p256) target = $region40
        $region39: #{tpu_custom_call.1} parent=35 // pred_region
          %259 = dma.done %s252, 1024
        $region40: #{tpu_custom_call.1} parent=35 // pred_fallthru
          _
        %s260 = sand.u32 %s24, 1
        %s261 = scalar_lea.sflag [#allocation6], %s260
        %s262 = sand.u32 %s74, 1
        %s263 = smul.addr %s262, 8
        %s264 = scalar_lea.vmem [#allocation5], %s263
        // Predicated region
        $region41: #{tpu_custom_call.1} parent=35 // pred_check
          %p265 = pneg %p87
        $region42: #{tpu_custom_call.1} parent=35 // pred_check_branch
          %267 = sbr.rel (%p265) target = $region44
        $region43: #{tpu_custom_call.1} parent=35 // pred_region
          %268 = dma.done %s261, 128
        $region44: #{tpu_custom_call.1} parent=35 // pred_fallthru
          _
        // Predicated region
        $region45: #{tpu_custom_call.1} parent=35 // pred_check
          %p269 = pneg %p108
        $region46: #{tpu_custom_call.1} parent=35 // pred_check_branch
          %271 = sbr.rel (%p269) target = $region48
        $region47: #{tpu_custom_call.1} parent=35 // pred_region
          %272 = dma.done [#allocation6], 2048
        $region48: #{tpu_custom_call.1} parent=35 // pred_fallthru
          _
        %s273 = sand.u32 %s46, 1
        %s274 = scalar_lea.sflag [#allocation3], %s273
        %s275 = sand.u32 %s46, 1
        %s276 = smul.addr %s275, 64
        %s277 = scalar_lea.vmem [#allocation2], %s276
        %p278 = pneg %p59
        %p279 = pneg %p56
        %s280 = sand.u32 %s24, 1
        %s281 = scalar_lea.sflag [#allocation6], %s280
        %s282 = sand.u32 %s74, 1
        %s283 = smul.addr %s282, 8
        %s284 = scalar_lea.vmem [#allocation5], %s283
        %p285 = pneg %p87
        %p286 = pneg %p84
        %p287 = pneg %p108
        %p288 = pneg %p105
        %p289 = pneg %p129
        %p290 = pneg %p126
        %p291 = pneg %p157
        %p292 = pneg %p154
        %s293 = sand.u32 %s144, 1
        %s294 = scalar_lea.sflag [#allocation4], %s293
        %s295 = sand.u32 %s144, 1
        %s296 = smul.addr %s295, 128
        %s297 = scalar_lea.vmem [#allocation8], %s296
        %s298 = smul.u32 16, %s29
        %s299 = ssub.s32 18, %s298
        %p300 = scmp.lt.s32.totalorder %s299, 16
        %s301 = scalar_select %p300, %s299, 16
        %s302 = smul.u32 64, %s301
        %v304 = vld [vmem:[%s255] sm:$0xf]
        %v305 = vld [vmem:[%s255 + $0x4] sm:$0xf]
        %v306 = vld [vmem:[%s255 + $0x8] sm:$0xf]
        %v307 = vld [vmem:[%s255 + $0xc] sm:$0xf]
        %v308 = vld [vmem:[%s255 + $0x10] sm:$0xf]
        %v309 = vld [vmem:[%s255 + $0x14] sm:$0xf]
        %v310 = vld [vmem:[%s255 + $0x18] sm:$0xf]
        %v311 = vld [vmem:[%s255 + $0x1c] sm:$0xf]
        %v312 = vld [vmem:[%s255 + $0x20] sm:$0xf]
        %v313 = vld [vmem:[%s255 + $0x24] sm:$0xf]
        %v314 = vld [vmem:[%s255 + $0x28] sm:$0xf]
        %v315 = vld [vmem:[%s255 + $0x2c] sm:$0xf]
        %v316 = vld [vmem:[%s255 + $0x30] sm:$0xf]
        %v317 = vld [vmem:[%s255 + $0x34] sm:$0xf]
        %v318 = vld [vmem:[%s255 + $0x38] sm:$0xf]
        %v319 = vld [vmem:[%s255 + $0x3c] sm:$0xf]
        %v320 = vld [vmem:[#allocation7] sm:$0xf]
        %v321 = vld [vmem:[#allocation7 + $0x4] sm:$0xf]
        %v322 = vld [vmem:[#allocation7 + $0x8] sm:$0xf]
        %v323 = vld [vmem:[#allocation7 + $0xc] sm:$0xf]
        %v324 = vld [vmem:[#allocation7 + $0x10] sm:$0xf]
        %v325 = vld [vmem:[#allocation7 + $0x14] sm:$0xf]
        %v326 = vld [vmem:[#allocation7 + $0x18] sm:$0xf]
        %v327 = vld [vmem:[#allocation7 + $0x1c] sm:$0xf]
        %v328 = vld [vmem:[#allocation7 + $0x20] sm:$0xf]
        %v329 = vld [vmem:[#allocation7 + $0x24] sm:$0xf]
        %v330 = vld [vmem:[#allocation7 + $0x28] sm:$0xf]
        %v331 = vld [vmem:[#allocation7 + $0x2c] sm:$0xf]
        %v332 = vld [vmem:[#allocation7 + $0x30] sm:$0xf]
        %v333 = vld [vmem:[#allocation7 + $0x34] sm:$0xf]
        %v334 = vld [vmem:[#allocation7 + $0x38] sm:$0xf]
        %v335 = vld [vmem:[#allocation7 + $0x3c] sm:$0xf]
        %v336 = vld [vmem:[%s3] sm:$0x1]
        %v338 = vlaneseq
        %v339 = vshrl.u32 %v338, 7
        %v340 = vsub.s32 0, %v339
        %v341 = vrot.slane %v336, %v340
        %v359 = vunpack.c.l.b16 %v304
        %v360 = vunpack.c.l.b16 %v305
        %v361 = vunpack.c.l.b16 %v306
        %v362 = vunpack.c.l.b16 %v307
        %v363 = vunpack.c.l.b16 %v308
        %v364 = vunpack.c.l.b16 %v309
        %v365 = vunpack.c.l.b16 %v310
        %v366 = vunpack.c.l.b16 %v311
        %v367 = vunpack.c.l.b16 %v312
        %v368 = vunpack.c.l.b16 %v313
        %v369 = vunpack.c.l.b16 %v314
        %v370 = vunpack.c.l.b16 %v315
        %v371 = vunpack.c.l.b16 %v316
        %v372 = vunpack.c.l.b16 %v317
        %v373 = vunpack.c.l.b16 %v318
        %v374 = vunpack.c.l.b16 %v319
        %v375 = vpack.c.b16 %v360, %v359
        %v376 = vpack.c.b16 %v362, %v361
        %v377 = vpack.c.b16 %v364, %v363
        %v378 = vpack.c.b16 %v366, %v365
        %v379 = vpack.c.b16 %v368, %v367
        %v380 = vpack.c.b16 %v370, %v369
        %v381 = vpack.c.b16 %v372, %v371
        %v382 = vpack.c.b16 %v374, %v373
        %v407 = vunpack.c.l.b16 %v320
        %v408 = vunpack.c.l.b16 %v321
        %v409 = vunpack.c.l.b16 %v322
        %v410 = vunpack.c.l.b16 %v323
        %v411 = vunpack.c.l.b16 %v324
        %v412 = vunpack.c.l.b16 %v325
        %v413 = vunpack.c.l.b16 %v326
        %v414 = vunpack.c.l.b16 %v327
        %v415 = vunpack.c.l.b16 %v328
        %v416 = vunpack.c.l.b16 %v329
        %v417 = vunpack.c.l.b16 %v330
        %v418 = vunpack.c.l.b16 %v331
        %v419 = vunpack.c.l.b16 %v332
        %v420 = vunpack.c.l.b16 %v333
        %v421 = vunpack.c.l.b16 %v334
        %v422 = vunpack.c.l.b16 %v335
        %v423 = vpack.c.b16 %v408, %v407
        %v424 = vpack.c.b16 %v410, %v409
        %v425 = vpack.c.b16 %v412, %v411
        %v426 = vpack.c.b16 %v414, %v413
        %v427 = vpack.c.b16 %v416, %v415
        %v428 = vpack.c.b16 %v418, %v417
        %v429 = vpack.c.b16 %v420, %v419
        %v430 = vpack.c.b16 %v422, %v421
        %439 = vmatprep.subr.bf16.mxu0 0
        %440 = vmatpush1.bf16.msra.mxu0 %v430
        %441 = vmatprep.subr.bf16.mxu0 0
        %442 = vmatpush1.bf16.msra.mxu0 %v429
        %443 = vmatprep.subr.bf16.mxu0 0
        %444 = vmatpush1.bf16.msra.mxu0 %v428
        %445 = vmatprep.subr.bf16.mxu0 0
        %446 = vmatpush1.bf16.msra.mxu0 %v427
        %447 = vmatprep.subr.bf16.mxu0 0
        %448 = vmatpush1.bf16.msra.mxu0 %v426
        %449 = vmatprep.subr.bf16.mxu0 0
        %450 = vmatpush1.bf16.msra.mxu0 %v425
        %451 = vmatprep.subr.bf16.mxu0 0
        %452 = vmatpush1.bf16.msra.mxu0 %v424
        %453 = vmatprep.subr.bf16.mxu0 0
        %454 = vmatpush1.bf16.msra.mxu0 %v423
        %455 = vmatprep.subr.bf16.mxu0 0
        %456 = vmatpush2.bf16.msra.mxu0 0
        %457 = vmatprep.subr.bf16.mxu0 0
        %458 = vmatpush2.bf16.msra.mxu0 0
        %459 = vmatprep.subr.bf16.mxu0 0
        %460 = vmatpush2.bf16.msra.mxu0 0
        %461 = vmatprep.subr.bf16.mxu0 0
        %462 = vmatpush2.bf16.msra.mxu0 0
        %463 = vmatprep.subr.bf16.mxu0 0
        %464 = vmatpush2.bf16.msra.mxu0 0
        %465 = vmatprep.subr.bf16.mxu0 0
        %466 = vmatpush2.bf16.msra.mxu0 0
        %467 = vmatprep.subr.bf16.mxu0 0
        %468 = vmatpush2.bf16.msra.mxu0 0
        %469 = vmatprep.subr.bf16.mxu0 0
        %470 = vmatpush2.bf16.msra.mxu0 0
        %471 = vmatprep.mubr.bf16.mxu0 0
        %472 = vmatmul.mubr.bf16.gmra.mxu0 %v375
        %v473 = vpop.f32.mrf.mxu0
        %v474 = vadd.f32 %v341, %v473
        %v475 = vpop.f32.mrf.mxu0
        %v476 = vpop.f32.mrf.mxu0
        %v477 = vadd.f32 %v341, %v476
        %v478 = vpop.f32.mrf.mxu0
        %479 = vmatprep.mubr.bf16.mxu0 0
        %480 = vmatmul.mubr.bf16.gmra.mxu0 %v376
        %v481 = vpop.f32.mrf.mxu0
        %v482 = vadd.f32 %v341, %v481
        %v483 = vpop.f32.mrf.mxu0
        %v484 = vpop.f32.mrf.mxu0
        %v485 = vadd.f32 %v341, %v484
        %v486 = vpop.f32.mrf.mxu0
        %487 = vmatprep.mubr.bf16.mxu0 0
        %488 = vmatmul.mubr.bf16.gmra.mxu0 %v377
        %v489 = vpop.f32.mrf.mxu0
        %v490 = vadd.f32 %v341, %v489
        %v491 = vpop.f32.mrf.mxu0
        %v492 = vpop.f32.mrf.mxu0
        %v493 = vadd.f32 %v341, %v492
        %v494 = vpop.f32.mrf.mxu0
        %495 = vmatprep.mubr.bf16.mxu0 0
        %496 = vmatmul.mubr.bf16.gmra.mxu0 %v378
        %v497 = vpop.f32.mrf.mxu0
        %v498 = vadd.f32 %v341, %v497
        %v499 = vpop.f32.mrf.mxu0
        %v500 = vpop.f32.mrf.mxu0
        %v501 = vadd.f32 %v341, %v500
        %v502 = vpop.f32.mrf.mxu0
        %503 = vmatprep.mubr.bf16.mxu0 0
        %504 = vmatmul.mubr.bf16.gmra.mxu0 %v379
        %v505 = vpop.f32.mrf.mxu0
        %v506 = vadd.f32 %v341, %v505
        %v507 = vpop.f32.mrf.mxu0
        %v508 = vpop.f32.mrf.mxu0
        %v509 = vadd.f32 %v341, %v508
        %v510 = vpop.f32.mrf.mxu0
        %511 = vmatprep.mubr.bf16.mxu0 0
        %512 = vmatmul.mubr.bf16.gmra.mxu0 %v380
        %v513 = vpop.f32.mrf.mxu0
        %v514 = vadd.f32 %v341, %v513
        %v515 = vpop.f32.mrf.mxu0
        %v516 = vpop.f32.mrf.mxu0
        %v517 = vadd.f32 %v341, %v516
        %v518 = vpop.f32.mrf.mxu0
        %519 = vmatprep.mubr.bf16.mxu0 0
        %520 = vmatmul.mubr.bf16.gmra.mxu0 %v381
        %v521 = vpop.f32.mrf.mxu0
        %v522 = vadd.f32 %v341, %v521
        %v523 = vpop.f32.mrf.mxu0
        %v524 = vpop.f32.mrf.mxu0
        %v525 = vadd.f32 %v341, %v524
        %v526 = vpop.f32.mrf.mxu0
        %527 = vmatprep.mubr.bf16.mxu0 0
        %528 = vmatmul.mubr.bf16.gmra.mxu0 %v382
        %v529 = vpop.f32.mrf.mxu0
        %v530 = vadd.f32 %v341, %v529
        %v531 = vpop.f32.mrf.mxu0
        %v532 = vpop.f32.mrf.mxu0
        %v533 = vadd.f32 %v341, %v532
        %v534 = vpop.f32.mrf.mxu0
        %535 = vdwg.mxu0
        %536 = vst [vmem:[%s297] sm:$0xff] %v474
        %537 = vst [vmem:[%s297 + $0x8] sm:$0xff] %v477
        %538 = vst [vmem:[%s297 + $0x10] sm:$0xff] %v482
        %539 = vst [vmem:[%s297 + $0x18] sm:$0xff] %v485
        %540 = vst [vmem:[%s297 + $0x20] sm:$0xff] %v490
        %541 = vst [vmem:[%s297 + $0x28] sm:$0xff] %v493
        %542 = vst [vmem:[%s297 + $0x30] sm:$0xff] %v498
        %543 = vst [vmem:[%s297 + $0x38] sm:$0xff] %v501
        %544 = vst [vmem:[%s297 + $0x40] sm:$0xff] %v506
        %545 = vst [vmem:[%s297 + $0x48] sm:$0xff] %v509
        %546 = vst [vmem:[%s297 + $0x50] sm:$0xff] %v514
        %547 = vst [vmem:[%s297 + $0x58] sm:$0xff] %v517
        %548 = vst [vmem:[%s297 + $0x60] sm:$0xff] %v522
        %549 = vst [vmem:[%s297 + $0x68] sm:$0xff] %v525
        %550 = vst [vmem:[%s297 + $0x70] sm:$0xff] %v530
        %551 = vst [vmem:[%s297 + $0x78] sm:$0xff] %v533
        %v552 = vld [vmem:[%s297] sm:$0xff]
        %v553 = vld [vmem:[%s297 + $0x8] sm:$0xff]
        %v554 = vld [vmem:[%s297 + $0x10] sm:$0xff]
        %v555 = vld [vmem:[%s297 + $0x18] sm:$0xff]
        %v556 = vld [vmem:[%s297 + $0x20] sm:$0xff]
        %v557 = vld [vmem:[%s297 + $0x28] sm:$0xff]
        %v558 = vld [vmem:[%s297 + $0x30] sm:$0xff]
        %v559 = vld [vmem:[%s297 + $0x38] sm:$0xff]
        %v560 = vld [vmem:[%s297 + $0x40] sm:$0xff]
        %v561 = vld [vmem:[%s297 + $0x48] sm:$0xff]
        %v562 = vld [vmem:[%s297 + $0x50] sm:$0xff]
        %v563 = vld [vmem:[%s297 + $0x58] sm:$0xff]
        %v564 = vld [vmem:[%s297 + $0x60] sm:$0xff]
        %v565 = vld [vmem:[%s297 + $0x68] sm:$0xff]
        %v566 = vld [vmem:[%s255 + $0x8] sm:$0xf]
        %v567 = vld [vmem:[%s255 + $0xc] sm:$0xf]
        %v568 = vld [vmem:[%s255 + $0x10] sm:$0xf]
        %v569 = vld [vmem:[%s255 + $0x14] sm:$0xf]
        %v570 = vld [vmem:[%s255 + $0x18] sm:$0xf]
        %v571 = vld [vmem:[%s255 + $0x1c] sm:$0xf]
        %v572 = vld [vmem:[%s255 + $0x20] sm:$0xf]
        %v573 = vld [vmem:[%s255 + $0x24] sm:$0xf]
        %v574 = vld [vmem:[%s255 + $0x28] sm:$0xf]
        %v575 = vld [vmem:[%s255 + $0x2c] sm:$0xf]
        %v576 = vld [vmem:[%s255 + $0x30] sm:$0xf]
        %v577 = vld [vmem:[%s255 + $0x34] sm:$0xf]
        %v578 = vld [vmem:[%s255 + $0x38] sm:$0xf]
        %v579 = vld [vmem:[%s255 + $0x3c] sm:$0xf]
        %s580 = scalar_lea.vmem [#allocation7], 64
        %v581 = vld [vmem:[%s580] sm:$0xf]
        %v582 = vld [vmem:[%s580 + $0x4] sm:$0xf]
        %v583 = vld [vmem:[%s580 + $0x8] sm:$0xf]
        %v584 = vld [vmem:[%s580 + $0xc] sm:$0xf]
        %v585 = vld [vmem:[%s580 + $0x10] sm:$0xf]
        %v586 = vld [vmem:[%s580 + $0x14] sm:$0xf]
        %v587 = vld [vmem:[%s580 + $0x18] sm:$0xf]
        %v588 = vld [vmem:[%s580 + $0x1c] sm:$0xf]
        %v589 = vld [vmem:[%s580 + $0x20] sm:$0xf]
        %v590 = vld [vmem:[%s580 + $0x24] sm:$0xf]
        %v591 = vld [vmem:[%s580 + $0x28] sm:$0xf]
        %v592 = vld [vmem:[%s580 + $0x2c] sm:$0xf]
        %v593 = vld [vmem:[%s580 + $0x30] sm:$0xf]
        %v594 = vld [vmem:[%s580 + $0x34] sm:$0xf]
        %v595 = vld [vmem:[%s580 + $0x38] sm:$0xf]
        %v596 = vld [vmem:[%s580 + $0x3c] sm:$0xf]
        %v611 = vunpack.c.l.b16 %v566
        %v612 = vunpack.c.l.b16 %v567
        %v613 = vunpack.c.l.b16 %v568
        %v614 = vunpack.c.l.b16 %v569
        %v615 = vunpack.c.l.b16 %v570
        %v616 = vunpack.c.l.b16 %v571
        %v617 = vunpack.c.l.b16 %v572
        %v618 = vunpack.c.l.b16 %v573
        %v619 = vunpack.c.l.b16 %v574
        %v620 = vunpack.c.l.b16 %v575
        %v621 = vunpack.c.l.b16 %v576
        %v622 = vunpack.c.l.b16 %v577
        %v623 = vunpack.c.l.b16 %v578
        %v624 = vunpack.c.l.b16 %v579
        %v625 = vpack.c.b16 %v612, %v611
        %v626 = vpack.c.b16 %v614, %v613
        %v627 = vpack.c.b16 %v616, %v615
        %v628 = vpack.c.b16 %v618, %v617
        %v629 = vpack.c.b16 %v620, %v619
        %v630 = vpack.c.b16 %v622, %v621
        %v631 = vpack.c.b16 %v624, %v623
        %v655 = vunpack.c.l.b16 %v581
        %v656 = vunpack.c.l.b16 %v582
        %v657 = vunpack.c.l.b16 %v583
        %v658 = vunpack.c.l.b16 %v584
        %v659 = vunpack.c.l.b16 %v585
        %v660 = vunpack.c.l.b16 %v586
        %v661 = vunpack.c.l.b16 %v587
        %v662 = vunpack.c.l.b16 %v588
        %v663 = vunpack.c.l.b16 %v589
        %v664 = vunpack.c.l.b16 %v590
        %v665 = vunpack.c.l.b16 %v591
        %v666 = vunpack.c.l.b16 %v592
        %v667 = vunpack.c.l.b16 %v593
        %v668 = vunpack.c.l.b16 %v594
        %v669 = vunpack.c.l.b16 %v595
        %v670 = vunpack.c.l.b16 %v596
        %v671 = vpack.c.b16 %v656, %v655
        %v672 = vpack.c.b16 %v658, %v657
        %v673 = vpack.c.b16 %v660, %v659
        %v674 = vpack.c.b16 %v662, %v661
        %v675 = vpack.c.b16 %v664, %v663
        %v676 = vpack.c.b16 %v666, %v665
        %v677 = vpack.c.b16 %v668, %v667
        %v678 = vpack.c.b16 %v670, %v669
        %687 = vmatprep.subr.bf16.mxu0 0
        %688 = vmatpush1.bf16.msra.mxu0 %v678
        %689 = vmatprep.subr.bf16.mxu0 0
        %690 = vmatpush1.bf16.msra.mxu0 %v677
        %691 = vmatprep.subr.bf16.mxu0 0
        %692 = vmatpush1.bf16.msra.mxu0 %v676
        %693 = vmatprep.subr.bf16.mxu0 0
        %694 = vmatpush1.bf16.msra.mxu0 %v675
        %695 = vmatprep.subr.bf16.mxu0 0
        %696 = vmatpush1.bf16.msra.mxu0 %v674
        %697 = vmatprep.subr.bf16.mxu0 0
        %698 = vmatpush1.bf16.msra.mxu0 %v673
        %699 = vmatprep.subr.bf16.mxu0 0
        %700 = vmatpush1.bf16.msra.mxu0 %v672
        %701 = vmatprep.subr.bf16.mxu0 0
        %702 = vmatpush1.bf16.msra.mxu0 %v671
        %703 = vmatprep.subr.bf16.mxu0 0
        %704 = vmatpush2.bf16.msra.mxu0 0
        %705 = vmatprep.subr.bf16.mxu0 0
        %706 = vmatpush2.bf16.msra.mxu0 0
        %707 = vmatprep.subr.bf16.mxu0 0
        %708 = vmatpush2.bf16.msra.mxu0 0
        %709 = vmatprep.subr.bf16.mxu0 0
        %710 = vmatpush2.bf16.msra.mxu0 0
        %711 = vmatprep.subr.bf16.mxu0 0
        %712 = vmatpush2.bf16.msra.mxu0 0
        %713 = vmatprep.subr.bf16.mxu0 0
        %714 = vmatpush2.bf16.msra.mxu0 0
        %715 = vmatprep.subr.bf16.mxu0 0
        %716 = vmatpush2.bf16.msra.mxu0 0
        %717 = vmatprep.subr.bf16.mxu0 0
        %718 = vmatpush2.bf16.msra.mxu0 0
        %719 = vmatprep.mubr.bf16.mxu0 0
        %720 = vmatmul.mubr.bf16.gmra.mxu0 %v625
        %v721 = vpop.f32.mrf.mxu0
        %v722 = vadd.f32 0.0, %v721
        %v723 = vpop.f32.mrf.mxu0
        %v724 = vpop.f32.mrf.mxu0
        %v725 = vadd.f32 0.0, %v724
        %v726 = vpop.f32.mrf.mxu0
        %727 = vmatprep.mubr.bf16.mxu0 0
        %728 = vmatmul.mubr.bf16.gmra.mxu0 %v626
        %v729 = vpop.f32.mrf.mxu0
        %v730 = vadd.f32 0.0, %v729
        %v731 = vpop.f32.mrf.mxu0
        %v732 = vpop.f32.mrf.mxu0
        %v733 = vadd.f32 0.0, %v732
        %v734 = vpop.f32.mrf.mxu0
        %735 = vmatprep.mubr.bf16.mxu0 0
        %736 = vmatmul.mubr.bf16.gmra.mxu0 %v627
        %v737 = vpop.f32.mrf.mxu0
        %v738 = vadd.f32 0.0, %v737
        %v739 = vpop.f32.mrf.mxu0
        %v740 = vpop.f32.mrf.mxu0
        %v741 = vadd.f32 0.0, %v740
        %v742 = vpop.f32.mrf.mxu0
        %743 = vmatprep.mubr.bf16.mxu0 0
        %744 = vmatmul.mubr.bf16.gmra.mxu0 %v628
        %v745 = vpop.f32.mrf.mxu0
        %v746 = vadd.f32 0.0, %v745
        %v747 = vpop.f32.mrf.mxu0
        %v748 = vpop.f32.mrf.mxu0
        %v749 = vadd.f32 0.0, %v748
        %v750 = vpop.f32.mrf.mxu0
        %751 = vmatprep.mubr.bf16.mxu0 0
        %752 = vmatmul.mubr.bf16.gmra.mxu0 %v629
        %v753 = vpop.f32.mrf.mxu0
        %v754 = vadd.f32 0.0, %v753
        %v755 = vpop.f32.mrf.mxu0
        %v756 = vpop.f32.mrf.mxu0
        %v757 = vadd.f32 0.0, %v756
        %v758 = vpop.f32.mrf.mxu0
        %759 = vmatprep.mubr.bf16.mxu0 0
        %760 = vmatmul.mubr.bf16.gmra.mxu0 %v630
        %v761 = vpop.f32.mrf.mxu0
        %v762 = vadd.f32 0.0, %v761
        %v763 = vpop.f32.mrf.mxu0
        %v764 = vpop.f32.mrf.mxu0
        %v765 = vadd.f32 0.0, %v764
        %v766 = vpop.f32.mrf.mxu0
        %767 = vmatprep.mubr.bf16.mxu0 0
        %768 = vmatmul.mubr.bf16.gmra.mxu0 %v631
        %v769 = vpop.f32.mrf.mxu0
        %v770 = vadd.f32 0.0, %v769
        %v771 = vpop.f32.mrf.mxu0
        %v772 = vpop.f32.mrf.mxu0
        %v773 = vadd.f32 0.0, %v772
        %v774 = vpop.f32.mrf.mxu0
        %775 = vdwg.mxu0
        %v776 = vadd.f32 %v552, %v722
        %v777 = vadd.f32 %v553, %v725
        %v778 = vadd.f32 %v554, %v730
        %v779 = vadd.f32 %v555, %v733
        %v780 = vadd.f32 %v556, %v738
        %v781 = vadd.f32 %v557, %v741
        %v782 = vadd.f32 %v558, %v746
        %v783 = vadd.f32 %v559, %v749
        %v784 = vadd.f32 %v560, %v754
        %v785 = vadd.f32 %v561, %v757
        %v786 = vadd.f32 %v562, %v762
        %v787 = vadd.f32 %v563, %v765
        %v788 = vadd.f32 %v564, %v770
        %v789 = vadd.f32 %v565, %v773
        %790 = vst [vmem:[%s297] sm:$0xff] %v776
        %791 = vst [vmem:[%s297 + $0x8] sm:$0xff] %v777
        %792 = vst [vmem:[%s297 + $0x10] sm:$0xff] %v778
        %793 = vst [vmem:[%s297 + $0x18] sm:$0xff] %v779
        %794 = vst [vmem:[%s297 + $0x20] sm:$0xff] %v780
        %795 = vst [vmem:[%s297 + $0x28] sm:$0xff] %v781
        %796 = vst [vmem:[%s297 + $0x30] sm:$0xff] %v782
        %797 = vst [vmem:[%s297 + $0x38] sm:$0xff] %v783
        %798 = vst [vmem:[%s297 + $0x40] sm:$0xff] %v784
        %799 = vst [vmem:[%s297 + $0x48] sm:$0xff] %v785
        %800 = vst [vmem:[%s297 + $0x50] sm:$0xff] %v786
        %801 = vst [vmem:[%s297 + $0x58] sm:$0xff] %v787
        %802 = vst [vmem:[%s297 + $0x60] sm:$0xff] %v788
        %803 = vst [vmem:[%s297 + $0x68] sm:$0xff] %v789
        %v804 = vld [vmem:[%s297 + $0x70] sm:$0xff]
        %v805 = vld [vmem:[%s297 + $0x78] sm:$0xff]
        %v806 = vld [vmem:[%s264] sm:$0xf]
        %v807 = vld [vmem:[%s264 + $0x4] sm:$0xf]
        %v808 = vld [vmem:[%s580] sm:$0xf]
        %v809 = vld [vmem:[%s580 + $0x4] sm:$0xf]
        %v810 = vld [vmem:[%s580 + $0x8] sm:$0xf]
        %v811 = vld [vmem:[%s580 + $0xc] sm:$0xf]
        %v812 = vld [vmem:[%s580 + $0x10] sm:$0xf]
        %v813 = vld [vmem:[%s580 + $0x14] sm:$0xf]
        %v814 = vld [vmem:[%s580 + $0x18] sm:$0xf]
        %v815 = vld [vmem:[%s580 + $0x1c] sm:$0xf]
        %v816 = vld [vmem:[%s580 + $0x20] sm:$0xf]
        %v817 = vld [vmem:[%s580 + $0x24] sm:$0xf]
        %v818 = vld [vmem:[%s580 + $0x28] sm:$0xf]
        %v819 = vld [vmem:[%s580 + $0x2c] sm:$0xf]
        %v820 = vld [vmem:[%s580 + $0x30] sm:$0xf]
        %v821 = vld [vmem:[%s580 + $0x34] sm:$0xf]
        %v822 = vld [vmem:[%s580 + $0x38] sm:$0xf]
        %v823 = vld [vmem:[%s580 + $0x3c] sm:$0xf]
        %v826 = vunpack.c.l.b16 %v806
        %v827 = vunpack.c.l.b16 %v807
        %v828 = vpack.c.b16 %v827, %v826
        %v846 = vunpack.c.l.b16 %v808
        %v847 = vunpack.c.l.b16 %v809
        %v848 = vunpack.c.l.b16 %v810
        %v849 = vunpack.c.l.b16 %v811
        %v850 = vunpack.c.l.b16 %v812
        %v851 = vunpack.c.l.b16 %v813
        %v852 = vunpack.c.l.b16 %v814
        %v853 = vunpack.c.l.b16 %v815
        %v854 = vunpack.c.l.b16 %v816
        %v855 = vunpack.c.l.b16 %v817
        %v856 = vunpack.c.l.b16 %v818
        %v857 = vunpack.c.l.b16 %v819
        %v858 = vunpack.c.l.b16 %v820
        %v859 = vunpack.c.l.b16 %v821
        %v860 = vunpack.c.l.b16 %v822
        %v861 = vunpack.c.l.b16 %v823
        %v862 = vpack.c.b16 %v847, %v846
        %v863 = vpack.c.b16 %v849, %v848
        %v864 = vpack.c.b16 %v851, %v850
        %v865 = vpack.c.b16 %v853, %v852
        %v866 = vpack.c.b16 %v855, %v854
        %v867 = vpack.c.b16 %v857, %v856
        %v868 = vpack.c.b16 %v859, %v858
        %v869 = vpack.c.b16 %v861, %v860
        %878 = vmatprep.subr.bf16.mxu0 0
        %879 = vmatpush1.bf16.msra.mxu0 %v869
        %880 = vmatprep.subr.bf16.mxu0 0
        %881 = vmatpush1.bf16.msra.mxu0 %v868
        %882 = vmatprep.subr.bf16.mxu0 0
        %883 = vmatpush1.bf16.msra.mxu0 %v867
        %884 = vmatprep.subr.bf16.mxu0 0
        %885 = vmatpush1.bf16.msra.mxu0 %v866
        %886 = vmatprep.subr.bf16.mxu0 0
        %887 = vmatpush1.bf16.msra.mxu0 %v865
        %888 = vmatprep.subr.bf16.mxu0 0
        %889 = vmatpush1.bf16.msra.mxu0 %v864
        %890 = vmatprep.subr.bf16.mxu0 0
        %891 = vmatpush1.bf16.msra.mxu0 %v863
        %892 = vmatprep.subr.bf16.mxu0 0
        %893 = vmatpush1.bf16.msra.mxu0 %v862
        %894 = vmatprep.subr.bf16.mxu0 0
        %895 = vmatpush2.bf16.msra.mxu0 0
        %896 = vmatprep.subr.bf16.mxu0 0
        %897 = vmatpush2.bf16.msra.mxu0 0
        %898 = vmatprep.subr.bf16.mxu0 0
        %899 = vmatpush2.bf16.msra.mxu0 0
        %900 = vmatprep.subr.bf16.mxu0 0
        %901 = vmatpush2.bf16.msra.mxu0 0
        %902 = vmatprep.subr.bf16.mxu0 0
        %903 = vmatpush2.bf16.msra.mxu0 0
        %904 = vmatprep.subr.bf16.mxu0 0
        %905 = vmatpush2.bf16.msra.mxu0 0
        %906 = vmatprep.subr.bf16.mxu0 0
        %907 = vmatpush2.bf16.msra.mxu0 0
        %908 = vmatprep.subr.bf16.mxu0 0
        %909 = vmatpush2.bf16.msra.mxu0 0
        %910 = vmatprep.mubr.bf16.mxu0 0
        %911 = vmatmul.mubr.bf16.gmra.mxu0 %v828
        %v912 = vpop.f32.mrf.mxu0
        %v913 = vadd.f32 0.0, %v912
        %v914 = vpop.f32.mrf.mxu0
        %v915 = vpop.f32.mrf.mxu0
        %v916 = vadd.f32 0.0, %v915
        %v917 = vpop.f32.mrf.mxu0
        %918 = vdwg.mxu0
        %v919 = vadd.f32 %v804, %v913
        %v920 = vadd.f32 %v805, %v916
        %921 = vst [vmem:[%s297 + $0x70] sm:$0xff] %v919
        %922 = vst [vmem:[%s297 + $0x78] sm:$0xff] %v920
        %s923 = sand.u32 %s144, 1
        %s924 = scalar_lea.sflag [#allocation4], %s923
        %s925 = sand.u32 %s144, 1
        %s926 = smul.addr %s925, 128
        %s927 = scalar_lea.vmem [#allocation8], %s926
        // Predicated region
        $region49: #{tpu_custom_call.1} parent=35 // pred_check
          %p928 = pneg %p154
        $region50: #{tpu_custom_call.1} parent=35 // pred_check_branch
          %930 = sbr.rel (%p928) target = $region52
        $region51: #{tpu_custom_call.1} parent=35 // pred_region
          %s932 = ssub.s32 2048, 2048
          %933 = vsyncadd %s924, %s932
          %s934 = smul.addr %s29, 16
          %s935 = smul.addr %s28, 16
          %s936 = sadd.s32 %s934, %s935
          %s937 = smul.addr %s936, 128
          %s938 = scalar_lea.hbm %s4, %s937
          %s939 = sshll.u32 %s927, 4
          %s940 = int_to_ptr.vmem [resolvable:$true] %s939
          %945 = dma.vmem_to_hbm [thread:$0]  %s940, 2048, %s938, %s924, 128, 128, 8
        $region52: #{tpu_custom_call.1} parent=35 // pred_fallthru
          _
      $region36: #{tpu_custom_call.1} parent=5 // pred_fallthru
        _
      %p946 = scmp.le.s32.totalorder 2, %s19
      // Predicated region
      $region53: #{tpu_custom_call.1} parent=5 // pred_check
        %p947 = pneg %p946
      $region54: #{tpu_custom_call.1} parent=5 // pred_check_branch
        %949 = sbr.rel (%p947) target = $region56
      $region55: #{tpu_custom_call.1} parent=5 // pred_region
        %s950 = ssub.s32 %s19, 2
        // Predicated region
        $region57: #{tpu_custom_call.1} parent=55 // pred_check
          %p951 = pneg %p160
        $region58: #{tpu_custom_call.1} parent=55 // pred_check_branch
          %953 = sbr.rel (%p951) target = $region60
        $region59: #{tpu_custom_call.1} parent=55 // pred_region
          %s954 = sand.u32 %s145, 1
          %s955 = scalar_lea.sflag [#allocation4], %s954
          %s956 = sand.u32 %s145, 1
          %s957 = smul.addr %s956, 128
          %s958 = scalar_lea.vmem [#allocation8], %s957
          %959 = dma.done %s955, 2048
        $region60: #{tpu_custom_call.1} parent=55 // pred_fallthru
          _
      $region56: #{tpu_custom_call.1} parent=5 // pred_fallthru
        _
    $region6: #{tpu_custom_call.1} parent=1 // loop_footer
      %s23 = sadd.s32 1, %s19
    $region7: #{tpu_custom_call.1} parent=1 // loop_footer_branch
      %18 = sbr.rel target = $region3
    $region8: #{tpu_custom_call.1} parent=1 // loop_exit
      _
    %960 = vsyncpa [#allocation3], 1
    %s961 = scalar_lea.sflag [#allocation3], 1
    %962 = vsyncpa %s961, 1
    %963 = vsyncpa [#allocation6], 1
    %s964 = scalar_lea.sflag [#allocation6], 1
    %965 = vsyncpa %s964, 1
    %966 = vsyncpa [#allocation4], 1
    %s967 = scalar_lea.sflag [#allocation4], 1
    %968 = vsyncpa %s967, 1

</llo_original>
